<compile_context>
chip_gen: v6e
topology: v6e:2x2x1
jax: 0.10.0
libtpu: 0.0.40
codegen_flags: <defaults>
</compile_context>

<pallas_src>
import functools

import jax
import jax.numpy as jnp
from jax.experimental import pallas as pl
from jax.experimental.pallas import tpu as pltpu

C_IN = 10            # input channels (fixed by the module)
GROUPS = 2
CG = C_IN // GROUPS  # 5 channels per group
O1, K1 = 64, 3       # conv1: out channels / kernel size
O2, K2 = 50, 5       # conv2
H1, H2, H3 = 120, 84, 3
LANES = 128          # lane-dense width used for patch / weights / output


def _round_up(a, m):
    return (a + m - 1) // m * m


def _textcnn_kernel(patch_ref, w_ref, out_ref, *, n_win, l_out1, l_out2):
    # patch: (tb, n_win, 128) f32; lanes [k*10 + c] = x[b, t+k, c], lanes 50..127 = 0.
    patch = patch_ref[...]
    tb = patch.shape[0]

    w_conv = w_ref[0]    # (128,128): cols 0..63 conv1, 64..113 conv2, rest 0
    w_fc1 = w_ref[1]     # rows 0..113 = W1.T, row 127 = b1
    w_fc2 = w_ref[2]     # rows 0..119 = W2.T, row 127 = b2
    w_fc3 = w_ref[3]     # rows 0..83  = W3.T, row 127 = b3, cols 0..2 valid

    # --- fused conv1+conv2: one im2col matmul over all windows (sublane-aligned) ---
    y = jnp.dot(patch.reshape(tb * n_win, LANES), w_conv,
                preferred_element_type=jnp.float32)
    y = jnp.maximum(y, 0.0).reshape(tb, n_win, LANES)            # ReLU

    # Mask invalid / padded windows before the time-max (ReLU>=0 => masking to 0 is safe).
    t_idx = jax.lax.broadcasted_iota(jnp.int32, (n_win, LANES), 0)
    col = jax.lax.broadcasted_iota(jnp.int32, (n_win, LANES), 1)
    limit = jnp.where(col < O1, l_out1, l_out2)
    y = jnp.where((t_idx < limit)[None, :, :], y, 0.0)

    # AdaptiveMaxPool1d(1) for both convs at once; feat lanes: [conv1 | conv2 | 0.. | 1]
    feat = jnp.max(y, axis=1)                                    # (tb, 128)
    ones_lane = jax.lax.broadcasted_iota(jnp.int32, (tb, LANES), 1) == (LANES - 1)
    feat = jnp.where(ones_lane, 1.0, feat)                       # bias lane for fc1

    # --- MLP: biases folded into row 127 of each packed weight ---
    h1 = jax.nn.sigmoid(jnp.dot(feat, w_fc1, preferred_element_type=jnp.float32))
    h1 = jnp.where(ones_lane, 1.0, h1)                           # bias lane for fc2
    h2 = jax.nn.sigmoid(jnp.dot(h1, w_fc2, preferred_element_type=jnp.float32))
    h2 = jnp.where(ones_lane, 1.0, h2)                           # bias lane for fc3
    # Lane-dense (tb, 128) store; only columns 0..2 carry real logits.
    out_ref[...] = jnp.dot(h2, w_fc3, preferred_element_type=jnp.float32)


def pack_params(params):
    """One-time packing of all weights into a single resident (4,128,128) block."""
    w1, w2, W1, b1, W2, b2, W3, b3 = params
    w = jnp.zeros((4, LANES, LANES), jnp.float32)

    # Fused grouped-conv weight: rows = k*10 + channel, cols = [conv1(64) | conv2(50) | 0]
    conv = jnp.zeros((K2, C_IN, LANES), jnp.float32)
    og1, og2 = O1 // GROUPS, O2 // GROUPS
    for g in range(GROUPS):
        w1g = jnp.transpose(w1[g * og1:(g + 1) * og1], (2, 1, 0))      # (K1, CG, og1)
        conv = conv.at[:K1, g * CG:(g + 1) * CG, g * og1:(g + 1) * og1].set(w1g)
        w2g = jnp.transpose(w2[g * og2:(g + 1) * og2], (2, 1, 0))      # (K2, CG, og2)
        conv = conv.at[:, g * CG:(g + 1) * CG, O1 + g * og2:O1 + (g + 1) * og2].set(w2g)
    w = w.at[0, :K2 * C_IN, :].set(conv.reshape(K2 * C_IN, LANES))

    # MLP weights transposed + biases folded into row 127 (ones-lane of activations).
    w = w.at[1, :O1 + O2, :H1].set(W1.T)
    w = w.at[1, LANES - 1, :H1].set(b1)
    w = w.at[2, :H1, :H2].set(W2.T)
    w = w.at[2, LANES - 1, :H2].set(b2)
    w = w.at[3, :H2, :H3].set(W3.T)
    w = w.at[3, LANES - 1, :H3].set(b3)
    return w


@functools.partial(jax.jit, static_argnames=("batch_tile",))
def textcnn_forward(x_bcl, w_packed, *, batch_tile=512):
    """x_bcl: (B, 10, L) float32 (PyTorch NCL layout). Returns (B, 3) logits."""
    B, _, L = x_bcl.shape
    l_out1 = L - K1 + 1
    l_out2 = L - K2 + 1
    n_win = max(_round_up(l_out1, 8), 8)          # sublane-aligned window count

    # Lane-dense im2col patch built once in the wrapper (kernel block last dim = 128).
    x = jnp.transpose(x_bcl, (0, 2, 1))                                   # (B, L, 10)
    x = jnp.pad(x, ((0, 0), (0, n_win + K2 - 1 - L), (0, 0)))             # zero time pad
    patch = jnp.concatenate([x[:, k:k + n_win, :] for k in range(K2)], axis=-1)
    patch = jnp.pad(patch, ((0, 0), (0, 0), (0, LANES - K2 * C_IN)))      # (B, n_win, 128)

    # Batch tile: multiple of 8; >= 2 grid steps when possible (v7x megacore); <= batch_tile.
    bt = _round_up(batch_tile, 8)
    if B > bt:
        tb = bt
    elif B >= 16:
        tb = _round_up(pl.cdiv(B, 2), 8)
    else:
        tb = _round_up(max(B, 1), 8)
    bp = _round_up(B, tb)
    if bp != B:
        patch = jnp.pad(patch, ((0, bp - B), (0, 0), (0, 0)))

    kernel = functools.partial(_textcnn_kernel, n_win=n_win,
                               l_out1=l_out1, l_out2=l_out2)
    out = pl.pallas_call(
        kernel,
        out_shape=jax.ShapeDtypeStruct((bp, LANES), jnp.float32),
        grid=(bp // tb,),
        in_specs=[
            pl.BlockSpec((tb, n_win, LANES), lambda i: (i, 0, 0)),   # batch-tiled patch
            pl.BlockSpec((4, LANES, LANES), lambda i: (0, 0, 0)),    # all weights, resident
        ],
        out_specs=pl.BlockSpec((tb, LANES), lambda i: (i, 0)),
        compiler_params=pltpu.CompilerParams(
            dimension_semantics=("parallel",),
            vmem_limit_bytes=48 * 1024 * 1024),
    )(patch, w_packed)
    return out[:B, :H3]


def textcnn_reference(x_bcl, params):
    """Pure-JAX reference matching the PyTorch forward exactly."""
    w1, w2, W1, b1, W2, b2, W3, b3 = params

    def conv1d_grouped(x, w):
        return jax.lax.conv_general_dilated(
            x, w, window_strides=(1,), padding='VALID',
            dimension_numbers=('NCH', 'OIH', 'NCH'),
            feature_group_count=GROUPS)

    o1 = jnp.max(jax.nn.relu(conv1d_grouped(x_bcl, w1)), axis=-1)    # (B, 64)
    o2 = jnp.max(jax.nn.relu(conv1d_grouped(x_bcl, w2)), axis=-1)    # (B, 50)
    feat = jnp.concatenate([o1, o2], axis=1)                         # (B, 114)
    h1 = jax.nn.sigmoid(feat @ W1.T + b1)
    h2 = jax.nn.sigmoid(h1 @ W2.T + b2)
    return h2 @ W3.T + b3


def init_params(key):
    ks = jax.random.split(key, 8)
    scale = 0.1
    w1 = scale * jax.random.normal(ks[0], (O1, CG, K1), jnp.float32)   # Conv1d(10,64,3,groups=2)
    w2 = scale * jax.random.normal(ks[1], (O2, CG, K2), jnp.float32)   # Conv1d(10,50,5,groups=2)
    W1 = scale * jax.random.normal(ks[2], (H1, O1 + O2), jnp.float32)  # Linear(114,120)
    b1 = scale * jax.random.normal(ks[3], (H1,), jnp.float32)
    W2 = scale * jax.random.normal(ks[4], (H2, H1), jnp.float32)       # Linear(120,84)
    b2 = scale * jax.random.normal(ks[5], (H2,), jnp.float32)
    W3 = scale * jax.random.normal(ks[6], (H3, H2), jnp.float32)       # Linear(84,3)
    b3 = scale * jax.random.normal(ks[7], (H3,), jnp.float32)
    return (w1, w2, W1, b1, W2, b2, W3, b3)


if __name__ == "__main__":
    key = jax.random.PRNGKey(0)
    k_x, k_p = jax.random.split(key)

    B, L = 4, 16                                            # small batch / sequence length
    x = jax.random.normal(k_x, (B, C_IN, L), jnp.float32)   # (B, 10, L), PyTorch NCL layout
    params = init_params(k_p)
    w_packed = pack_params(params)                          # one-time weight packing

    out = jax.block_until_ready(textcnn_forward(x, w_packed))
    ref = jax.block_until_ready(textcnn_reference(x, params))

    assert out.shape == (B, H3), out.shape
    if not jnp.allclose(out, ref, atol=1e-4, rtol=1e-4):
        raise AssertionError(f"mismatch: max abs err = {jnp.max(jnp.abs(out - ref))}")
    print("KERNEL_OK")
</pallas_src>

<mosaic_0001>
module attributes {stable_mosaic.version = 11 : i64} {
  func.func @_textcnn_kernel(%arg0: i32, %arg1: memref<8x16x128xf32, #tpu.memory_space<vmem>>, %arg2: memref<4x128x128xf32, #tpu.memory_space<vmem>>, %arg3: memref<8x128xf32, #tpu.memory_space<vmem>>) attributes {dimension_semantics = [#tpu.dimension_semantics<parallel>], iteration_bounds = array<i64: 1>, scalar_prefetch = 0 : i64, scratch_operands = 0 : i64, tpu.core_type = #tpu.core_type<tc>, window_params = [{transform_indices = @transform_0, window_bounds = array<i64: 8, 16, 128>}, {pipeline_mode = #tpu.pipeline_mode<synchronous>, transform_indices = @transform_1, window_bounds = array<i64: 4, 128, 128>}, {transform_indices = @transform_2, window_bounds = array<i64: 8, 128>}]} {
    %c0 = arith.constant 0 : index
    %c0_0 = arith.constant 0 : index
    %c0_1 = arith.constant 0 : index
    %0 = vector.load %arg1[%c0, %c0_0, %c0_1] : memref<8x16x128xf32, #tpu.memory_space<vmem>>, vector<8x16x128xf32>
    %c0_2 = arith.constant 0 : index
    %c0_3 = arith.constant 0 : index
    %c0_4 = arith.constant 0 : index
    %1 = vector.load %arg2[%c0_2, %c0_3, %c0_4] : memref<4x128x128xf32, #tpu.memory_space<vmem>>, vector<1x128x128xf32>
    %2 = vector.shape_cast %1 : vector<1x128x128xf32> to vector<128x128xf32>
    %c1 = arith.constant 1 : index
    %c0_5 = arith.constant 0 : index
    %c0_6 = arith.constant 0 : index
    %3 = vector.load %arg2[%c1, %c0_5, %c0_6] : memref<4x128x128xf32, #tpu.memory_space<vmem>>, vector<1x128x128xf32>
    %4 = vector.shape_cast %3 : vector<1x128x128xf32> to vector<128x128xf32>
    %c2 = arith.constant 2 : index
    %c0_7 = arith.constant 0 : index
    %c0_8 = arith.constant 0 : index
    %5 = vector.load %arg2[%c2, %c0_7, %c0_8] : memref<4x128x128xf32, #tpu.memory_space<vmem>>, vector<1x128x128xf32>
    %6 = vector.shape_cast %5 : vector<1x128x128xf32> to vector<128x128xf32>
    %c3 = arith.constant 3 : index
    %c0_9 = arith.constant 0 : index
    %c0_10 = arith.constant 0 : index
    %7 = vector.load %arg2[%c3, %c0_9, %c0_10] : memref<4x128x128xf32, #tpu.memory_space<vmem>>, vector<1x128x128xf32>
    %8 = vector.shape_cast %7 : vector<1x128x128xf32> to vector<128x128xf32>
    %9 = vector.shape_cast %0 : vector<8x16x128xf32> to vector<128x128xf32>
    %cst = arith.constant dense<0.000000e+00> : vector<128x128xf32>
    %10 = tpu.matmul %9, %2, %cst {dimension_numbers = #tpu.dot_dimension_numbers<[1], [0], [0], [1], [0, 0, 1, 1], [], []>} : vector<128x128xf32>, vector<128x128xf32>, vector<128x128xf32> -> vector<128x128xf32>
    %cst_11 = arith.constant 0.000000e+00 : f32
    %11 = vector.broadcast %cst_11 : f32 to vector<128x128xf32>
    %12 = arith.maximumf %10, %11 : vector<128x128xf32>
    %13 = vector.shape_cast %12 : vector<128x128xf32> to vector<8x16x128xf32>
    %14 = tpu.iota {dimensions = array<i32: 0>} : vector<16x128xi32>
    %15 = tpu.iota {dimensions = array<i32: 1>} : vector<16x128xi32>
    %c64_i32 = arith.constant 64 : i32
    %16 = vector.broadcast %c64_i32 : i32 to vector<16x128xi32>
    %17 = arith.cmpi slt, %15, %16 : vector<16x128xi32>
    %c14_i32 = arith.constant 14 : i32
    %c12_i32 = arith.constant 12 : i32
    %18 = vector.broadcast %c14_i32 : i32 to vector<16x128xi32>
    %19 = vector.broadcast %c12_i32 : i32 to vector<16x128xi32>
    %20 = arith.select %17, %18, %19 : vector<16x128xi1>, vector<16x128xi32>
    %21 = arith.cmpi slt, %14, %20 : vector<16x128xi32>
    %22 = vector.shape_cast %21 : vector<16x128xi1> to vector<1x16x128xi1>
    %cst_12 = arith.constant 0.000000e+00 : f32
    %23 = vector.shape_cast %22 : vector<1x16x128xi1> to vector<1x16x128xi1>
    %24 = vector.broadcast %23 : vector<1x16x128xi1> to vector<8x16x128xi1>
    %25 = vector.broadcast %cst_12 : f32 to vector<8x16x128xf32>
    %26 = arith.select %24, %13, %25 : vector<8x16x128xi1>, vector<8x16x128xf32>
    %cst_13 = arith.constant dense<0xFF800000> : vector<8x128xf32>
    %27 = vector.multi_reduction <maximumf>, %26, %cst_13 [1] : vector<8x16x128xf32> to vector<8x128xf32>
    %28 = tpu.iota {dimensions = array<i32: 1>} : vector<8x128xi32>
    %c127_i32 = arith.constant 127 : i32
    %29 = vector.broadcast %c127_i32 : i32 to vector<8x128xi32>
    %30 = arith.cmpi eq, %28, %29 : vector<8x128xi32>
    %cst_14 = arith.constant 1.000000e+00 : f32
    %31 = vector.broadcast %cst_14 : f32 to vector<8x128xf32>
    %32 = arith.select %30, %31, %27 : vector<8x128xi1>, vector<8x128xf32>
    %cst_15 = arith.constant dense<0.000000e+00> : vector<8x128xf32>
    %33 = tpu.matmul %32, %4, %cst_15 {dimension_numbers = #tpu.dot_dimension_numbers<[1], [0], [0], [1], [0, 0, 1, 1], [], []>} : vector<8x128xf32>, vector<128x128xf32>, vector<8x128xf32> -> vector<8x128xf32>
    %34 = arith.negf %33 : vector<8x128xf32>
    %35 = math.exp %34 : vector<8x128xf32>
    %cst_16 = arith.constant 1.000000e+00 : f32
    %36 = vector.broadcast %cst_16 : f32 to vector<8x128xf32>
    %37 = arith.addf %36, %35 : vector<8x128xf32>
    %38 = arith.divf %36, %37 : vector<8x128xf32>
    %cst_17 = arith.constant 1.000000e+00 : f32
    %39 = vector.broadcast %cst_17 : f32 to vector<8x128xf32>
    %40 = arith.select %30, %39, %38 : vector<8x128xi1>, vector<8x128xf32>
    %cst_18 = arith.constant dense<0.000000e+00> : vector<8x128xf32>
    %41 = tpu.matmul %40, %6, %cst_18 {dimension_numbers = #tpu.dot_dimension_numbers<[1], [0], [0], [1], [0, 0, 1, 1], [], []>} : vector<8x128xf32>, vector<128x128xf32>, vector<8x128xf32> -> vector<8x128xf32>
    %42 = arith.negf %41 : vector<8x128xf32>
    %43 = math.exp %42 : vector<8x128xf32>
    %cst_19 = arith.constant 1.000000e+00 : f32
    %44 = vector.broadcast %cst_19 : f32 to vector<8x128xf32>
    %45 = arith.addf %44, %43 : vector<8x128xf32>
    %46 = arith.divf %44, %45 : vector<8x128xf32>
    %cst_20 = arith.constant 1.000000e+00 : f32
    %47 = vector.broadcast %cst_20 : f32 to vector<8x128xf32>
    %48 = arith.select %30, %47, %46 : vector<8x128xi1>, vector<8x128xf32>
    %cst_21 = arith.constant dense<0.000000e+00> : vector<8x128xf32>
    %49 = tpu.matmul %48, %8, %cst_21 {dimension_numbers = #tpu.dot_dimension_numbers<[1], [0], [0], [1], [0, 0, 1, 1], [], []>} : vector<8x128xf32>, vector<128x128xf32>, vector<8x128xf32> -> vector<8x128xf32>
    %c0_22 = arith.constant 0 : index
    %c0_23 = arith.constant 0 : index
    %50 = vector.load %arg3[%c0_22, %c0_23] : memref<8x128xf32, #tpu.memory_space<vmem>>, vector<8x128xf32>
    tpu.vector_store %arg3[%c0_22, %c0_23], %49 {strides = array<i32>} : memref<8x128xf32, #tpu.memory_space<vmem>>, vector<8x128xf32>,
    return
  }
  func.func @transform_0(%arg0: i32) -> (i32, i32, i32) {
    %c0_i32 = arith.constant 0 : i32
    %c0_i32_0 = arith.constant 0 : i32
    %c0_i32_1 = arith.constant 0 : i32
    return %arg0, %c0_i32, %c0_i32_0 : i32, i32, i32
  }
  func.func @transform_1(%arg0: i32) -> (i32, i32, i32) {
    %c0_i32 = arith.constant 0 : i32
    %c0_i32_0 = arith.constant 0 : i32
    %c0_i32_1 = arith.constant 0 : i32
    %c0_i32_2 = arith.constant 0 : i32
    return %c0_i32, %c0_i32_0, %c0_i32_1 : i32, i32, i32
  }
  func.func @transform_2(%arg0: i32) -> (i32, i32) {
    %c0_i32 = arith.constant 0 : i32
    %c0_i32_0 = arith.constant 0 : i32
    return %arg0, %c0_i32 : i32, i32
  }
}

</mosaic_0001>

<llo_original>
// kernel: textcnn_forward.1
$region0: #{textcnn_forward.1}
  #allocation0 [shape = 'u32[]', space=smem, size = 0x4, offset = 0x4, fixed_abs, tag = 'smem constant byte address 0x4 - core index']
  #allocation1 [shape = 'u32[144,128]{1,0:T(1,128)}', space=vmem, size = 0x12000, scoped, tag = 'internal scratch']
  %s0 = inlined_call_operand.vmem [shape: f32[8,16,128], index: 0, kind: input, shape index: {}]
  %s1 = inlined_call_operand.vmem [shape: f32[4,128,128], index: 1, kind: input, shape index: {}]
  %s2 = inlined_call_operand.vmem [shape: f32[8,128], index: 2, kind: output, shape index: {}]
  %s3 = sld [smem:[#allocation0]]
  $region18: #{textcnn_forward.1} parent=0
    _
  %s5 = ssub.s32 1, %s3
  %s6 = scalar_select 0, %s5, %s3
  // Predicated region
  $region2: #{textcnn_forward.1} parent=0 // pred_check
    _
  $region3: #{textcnn_forward.1} parent=0 // pred_check_branch
    %8 = sbr.rel (0) target = $region5
  $region4: #{textcnn_forward.1} parent=0 // pred_region
    _
  $region5: #{textcnn_forward.1} parent=0 // pred_fallthru
    _
  // Predicated region
  $region6: #{textcnn_forward.1} parent=0 // pred_check
    _
  $region7: #{textcnn_forward.1} parent=0 // pred_check_branch
    %10 = sbr.rel (0) target = $region9
  $region8: #{textcnn_forward.1} parent=0 // pred_region
    _
  $region9: #{textcnn_forward.1} parent=0 // pred_fallthru
    _
  %v11 = vld [vmem:[%s0] sm:$0xff]
  %v12 = vld [vmem:[%s0 + $0x8] sm:$0xff]
  %v13 = vld [vmem:[%s0 + $0x10] sm:$0xff]
  %v14 = vld [vmem:[%s0 + $0x18] sm:$0xff]
  %v15 = vld [vmem:[%s0 + $0x20] sm:$0xff]
  %v16 = vld [vmem:[%s0 + $0x28] sm:$0xff]
  %v17 = vld [vmem:[%s0 + $0x30] sm:$0xff]
  %v18 = vld [vmem:[%s0 + $0x38] sm:$0xff]
  %v19 = vld [vmem:[%s0 + $0x40] sm:$0xff]
  %v20 = vld [vmem:[%s0 + $0x48] sm:$0xff]
  %v21 = vld [vmem:[%s0 + $0x50] sm:$0xff]
  %v22 = vld [vmem:[%s0 + $0x58] sm:$0xff]
  %v23 = vld [vmem:[%s0 + $0x60] sm:$0xff]
  %v24 = vld [vmem:[%s0 + $0x68] sm:$0xff]
  %v25 = vld [vmem:[%s0 + $0x70] sm:$0xff]
  %v26 = vld [vmem:[%s0 + $0x78] sm:$0xff]
  %v27 = vld [vmem:[%s1] sm:$0xff]
  %v28 = vld [vmem:[%s1 + $0x8] sm:$0xff]
  %v29 = vld [vmem:[%s1 + $0x10] sm:$0xff]
  %v30 = vld [vmem:[%s1 + $0x18] sm:$0xff]
  %v31 = vld [vmem:[%s1 + $0x20] sm:$0xff]
  %v32 = vld [vmem:[%s1 + $0x28] sm:$0xff]
  %v33 = vld [vmem:[%s1 + $0x30] sm:$0xff]
  %v34 = vld [vmem:[%s1 + $0x38] sm:$0xff]
  %v35 = vld [vmem:[%s1 + $0x40] sm:$0xff]
  %v36 = vld [vmem:[%s1 + $0x48] sm:$0xff]
  %v37 = vld [vmem:[%s1 + $0x50] sm:$0xff]
  %v38 = vld [vmem:[%s1 + $0x58] sm:$0xff]
  %v39 = vld [vmem:[%s1 + $0x60] sm:$0xff]
  %v40 = vld [vmem:[%s1 + $0x68] sm:$0xff]
  %v41 = vld [vmem:[%s1 + $0x70] sm:$0xff]
  %v42 = vld [vmem:[%s1 + $0x78] sm:$0xff]
  %s43 = scalar_lea.vmem %s1, 128
  %v44 = vld [vmem:[%s43] sm:$0xff]
  %v45 = vld [vmem:[%s43 + $0x8] sm:$0xff]
  %v46 = vld [vmem:[%s43 + $0x10] sm:$0xff]
  %v47 = vld [vmem:[%s43 + $0x18] sm:$0xff]
  %v48 = vld [vmem:[%s43 + $0x20] sm:$0xff]
  %v49 = vld [vmem:[%s43 + $0x28] sm:$0xff]
  %v50 = vld [vmem:[%s43 + $0x30] sm:$0xff]
  %v51 = vld [vmem:[%s43 + $0x38] sm:$0xff]
  %v52 = vld [vmem:[%s43 + $0x40] sm:$0xff]
  %v53 = vld [vmem:[%s43 + $0x48] sm:$0xff]
  %v54 = vld [vmem:[%s43 + $0x50] sm:$0xff]
  %v55 = vld [vmem:[%s43 + $0x58] sm:$0xff]
  %v56 = vld [vmem:[%s43 + $0x60] sm:$0xff]
  %v57 = vld [vmem:[%s43 + $0x68] sm:$0xff]
  %v58 = vld [vmem:[%s43 + $0x70] sm:$0xff]
  %v59 = vld [vmem:[%s43 + $0x78] sm:$0xff]
  %s60 = scalar_lea.vmem %s1, 256
  %v61 = vld [vmem:[%s60] sm:$0xff]
  %v62 = vld [vmem:[%s60 + $0x8] sm:$0xff]
  %v63 = vld [vmem:[%s60 + $0x10] sm:$0xff]
  %v64 = vld [vmem:[%s60 + $0x18] sm:$0xff]
  %v65 = vld [vmem:[%s60 + $0x20] sm:$0xff]
  %v66 = vld [vmem:[%s60 + $0x28] sm:$0xff]
  %v67 = vld [vmem:[%s60 + $0x30] sm:$0xff]
  %v68 = vld [vmem:[%s60 + $0x38] sm:$0xff]
  %v69 = vld [vmem:[%s60 + $0x40] sm:$0xff]
  %v70 = vld [vmem:[%s60 + $0x48] sm:$0xff]
  %v71 = vld [vmem:[%s60 + $0x50] sm:$0xff]
  %v72 = vld [vmem:[%s60 + $0x58] sm:$0xff]
  %v73 = vld [vmem:[%s60 + $0x60] sm:$0xff]
  %v74 = vld [vmem:[%s60 + $0x68] sm:$0xff]
  %v75 = vld [vmem:[%s60 + $0x70] sm:$0xff]
  %v76 = vld [vmem:[%s60 + $0x78] sm:$0xff]
  %s77 = scalar_lea.vmem %s1, 384
  %v78 = vld [vmem:[%s77] sm:$0xff]
  %v79 = vld [vmem:[%s77 + $0x8] sm:$0xff]
  %v80 = vld [vmem:[%s77 + $0x10] sm:$0xff]
  %v81 = vld [vmem:[%s77 + $0x18] sm:$0xff]
  %v82 = vld [vmem:[%s77 + $0x20] sm:$0xff]
  %v83 = vld [vmem:[%s77 + $0x28] sm:$0xff]
  %v84 = vld [vmem:[%s77 + $0x30] sm:$0xff]
  %v85 = vld [vmem:[%s77 + $0x38] sm:$0xff]
  %v86 = vld [vmem:[%s77 + $0x40] sm:$0xff]
  %v87 = vld [vmem:[%s77 + $0x48] sm:$0xff]
  %v88 = vld [vmem:[%s77 + $0x50] sm:$0xff]
  %v89 = vld [vmem:[%s77 + $0x58] sm:$0xff]
  %v90 = vld [vmem:[%s77 + $0x60] sm:$0xff]
  %v91 = vld [vmem:[%s77 + $0x68] sm:$0xff]
  %v92 = vld [vmem:[%s77 + $0x70] sm:$0xff]
  %v93 = vld [vmem:[%s77 + $0x78] sm:$0xff]
  %94 = vmatprep.subr.mxu0 0.0
  %95 = vmatpush1.msra.mxu0 %v42
  %96 = vmatprep.subr.mxu0 0.0
  %97 = vmatpush1.msra.mxu0 %v41
  %98 = vmatprep.subr.mxu0 0.0
  %99 = vmatpush1.msra.mxu0 %v40
  %100 = vmatprep.subr.mxu0 0.0
  %101 = vmatpush1.msra.mxu0 %v39
  %102 = vmatprep.subr.mxu0 0.0
  %103 = vmatpush1.msra.mxu0 %v38
  %104 = vmatprep.subr.mxu0 0.0
  %105 = vmatpush1.msra.mxu0 %v37
  %106 = vmatprep.subr.mxu0 0.0
  %107 = vmatpush1.msra.mxu0 %v36
  %108 = vmatprep.subr.mxu0 0.0
  %109 = vmatpush1.msra.mxu0 %v35
  %110 = vmatprep.subr.mxu0 0.0
  %111 = vmatpush1.msra.mxu0 %v34
  %112 = vmatprep.subr.mxu0 0.0
  %113 = vmatpush1.msra.mxu0 %v33
  %114 = vmatprep.subr.mxu0 0.0
  %115 = vmatpush1.msra.mxu0 %v32
  %116 = vmatprep.subr.mxu0 0.0
  %117 = vmatpush1.msra.mxu0 %v31
  %118 = vmatprep.subr.mxu0 0.0
  %119 = vmatpush1.msra.mxu0 %v30
  %120 = vmatprep.subr.mxu0 0.0
  %121 = vmatpush1.msra.mxu0 %v29
  %122 = vmatprep.subr.mxu0 0.0
  %123 = vmatpush1.msra.mxu0 %v28
  %124 = vmatprep.subr.mxu0 0.0
  %125 = vmatpush1.msra.mxu0 %v27
  %126 = vmatprep.subr.mxu0 0.0
  %127 = vmatpush2.msra.mxu0 0.0
  %128 = vmatprep.subr.mxu0 0.0
  %129 = vmatpush2.msra.mxu0 0.0
  %130 = vmatprep.subr.mxu0 0.0
  %131 = vmatpush2.msra.mxu0 0.0
  %132 = vmatprep.subr.mxu0 0.0
  %133 = vmatpush2.msra.mxu0 0.0
  %134 = vmatprep.subr.mxu0 0.0
  %135 = vmatpush2.msra.mxu0 0.0
  %136 = vmatprep.subr.mxu0 0.0
  %137 = vmatpush2.msra.mxu0 0.0
  %138 = vmatprep.subr.mxu0 0.0
  %139 = vmatpush2.msra.mxu0 0.0
  %140 = vmatprep.subr.mxu0 0.0
  %141 = vmatpush2.msra.mxu0 0.0
  %142 = vmatprep.subr.mxu0 0.0
  %143 = vmatpush2.msra.mxu0 0.0
  %144 = vmatprep.subr.mxu0 0.0
  %145 = vmatpush2.msra.mxu0 0.0
  %146 = vmatprep.subr.mxu0 0.0
  %147 = vmatpush2.msra.mxu0 0.0
  %148 = vmatprep.subr.mxu0 0.0
  %149 = vmatpush2.msra.mxu0 0.0
  %150 = vmatprep.subr.mxu0 0.0
  %151 = vmatpush2.msra.mxu0 0.0
  %152 = vmatprep.subr.mxu0 0.0
  %153 = vmatpush2.msra.mxu0 0.0
  %154 = vmatprep.subr.mxu0 0.0
  %155 = vmatpush2.msra.mxu0 0.0
  %156 = vmatprep.subr.mxu0 0.0
  %157 = vmatpush2.msra.mxu0 0.0
  %158 = vmatprep.mubr.f32.mxu0 0.0
  %159 = vmatmul.mubr.f32.gmra.mxu0 %v11
  %v160 = vpop.f32.mrf.mxu0
  %v161 = vadd.f32 0.0, %v160
  %v162 = vpop.f32.mrf.mxu0
  %163 = vmatprep.mubr.f32.mxu0 0.0
  %164 = vmatmul.mubr.f32.gmra.mxu0 %v12
  %v165 = vpop.f32.mrf.mxu0
  %v166 = vadd.f32 0.0, %v165
  %v167 = vpop.f32.mrf.mxu0
  %168 = vmatprep.mubr.f32.mxu0 0.0
  %169 = vmatmul.mubr.f32.gmra.mxu0 %v13
  %v170 = vpop.f32.mrf.mxu0
  %v171 = vadd.f32 0.0, %v170
  %v172 = vpop.f32.mrf.mxu0
  %173 = vmatprep.mubr.f32.mxu0 0.0
  %174 = vmatmul.mubr.f32.gmra.mxu0 %v14
  %v175 = vpop.f32.mrf.mxu0
  %v176 = vadd.f32 0.0, %v175
  %v177 = vpop.f32.mrf.mxu0
  %178 = vmatprep.mubr.f32.mxu0 0.0
  %179 = vmatmul.mubr.f32.gmra.mxu0 %v15
  %v180 = vpop.f32.mrf.mxu0
  %v181 = vadd.f32 0.0, %v180
  %v182 = vpop.f32.mrf.mxu0
  %183 = vmatprep.mubr.f32.mxu0 0.0
  %184 = vmatmul.mubr.f32.gmra.mxu0 %v16
  %v185 = vpop.f32.mrf.mxu0
  %v186 = vadd.f32 0.0, %v185
  %v187 = vpop.f32.mrf.mxu0
  %188 = vmatprep.mubr.f32.mxu0 0.0
  %189 = vmatmul.mubr.f32.gmra.mxu0 %v17
  %v190 = vpop.f32.mrf.mxu0
  %v191 = vadd.f32 0.0, %v190
  %v192 = vpop.f32.mrf.mxu0
  %193 = vmatprep.mubr.f32.mxu0 0.0
  %194 = vmatmul.mubr.f32.gmra.mxu0 %v18
  %v195 = vpop.f32.mrf.mxu0
  %v196 = vadd.f32 0.0, %v195
  %v197 = vpop.f32.mrf.mxu0
  %198 = vmatprep.mubr.f32.mxu0 0.0
  %199 = vmatmul.mubr.f32.gmra.mxu0 %v19
  %v200 = vpop.f32.mrf.mxu0
  %v201 = vadd.f32 0.0, %v200
  %v202 = vpop.f32.mrf.mxu0
  %203 = vmatprep.mubr.f32.mxu0 0.0
  %204 = vmatmul.mubr.f32.gmra.mxu0 %v20
  %v205 = vpop.f32.mrf.mxu0
  %v206 = vadd.f32 0.0, %v205
  %v207 = vpop.f32.mrf.mxu0
  %208 = vmatprep.mubr.f32.mxu0 0.0
  %209 = vmatmul.mubr.f32.gmra.mxu0 %v21
  %v210 = vpop.f32.mrf.mxu0
  %v211 = vadd.f32 0.0, %v210
  %v212 = vpop.f32.mrf.mxu0
  %213 = vmatprep.mubr.f32.mxu0 0.0
  %214 = vmatmul.mubr.f32.gmra.mxu0 %v22
  %v215 = vpop.f32.mrf.mxu0
  %v216 = vadd.f32 0.0, %v215
  %v217 = vpop.f32.mrf.mxu0
  %218 = vmatprep.mubr.f32.mxu0 0.0
  %219 = vmatmul.mubr.f32.gmra.mxu0 %v23
  %v220 = vpop.f32.mrf.mxu0
  %v221 = vadd.f32 0.0, %v220
  %v222 = vpop.f32.mrf.mxu0
  %223 = vmatprep.mubr.f32.mxu0 0.0
  %224 = vmatmul.mubr.f32.gmra.mxu0 %v24
  %v225 = vpop.f32.mrf.mxu0
  %v226 = vadd.f32 0.0, %v225
  %v227 = vpop.f32.mrf.mxu0
  %228 = vmatprep.mubr.f32.mxu0 0.0
  %229 = vmatmul.mubr.f32.gmra.mxu0 %v25
  %v230 = vpop.f32.mrf.mxu0
  %v231 = vadd.f32 0.0, %v230
  %v232 = vpop.f32.mrf.mxu0
  %233 = vmatprep.mubr.f32.mxu0 0.0
  %234 = vmatmul.mubr.f32.gmra.mxu0 %v26
  %v235 = vpop.f32.mrf.mxu0
  %v236 = vadd.f32 0.0, %v235
  %v237 = vpop.f32.mrf.mxu0
  %238 = vdwg.mxu0
  %v239 = vmax.f32 %v161, 0.0
  %v240 = vmax.f32 %v166, 0.0
  %v241 = vmax.f32 %v171, 0.0
  %v242 = vmax.f32 %v176, 0.0
  %v243 = vmax.f32 %v181, 0.0
  %v244 = vmax.f32 %v186, 0.0
  %v245 = vmax.f32 %v191, 0.0
  %v246 = vmax.f32 %v196, 0.0
  %v247 = vmax.f32 %v201, 0.0
  %v248 = vmax.f32 %v206, 0.0
  %v249 = vmax.f32 %v211, 0.0
  %v250 = vmax.f32 %v216, 0.0
  %v251 = vmax.f32 %v221, 0.0
  %v252 = vmax.f32 %v226, 0.0
  %v253 = vmax.f32 %v231, 0.0
  %v254 = vmax.f32 %v236, 0.0
  %v255 = vlaneseq
  %v256 = vshrl.u32 %v255, 7
  %v257 = vadd.s32 %v256, 8
  %v258 = vlaneseq
  %v259 = vand.u32 %v258, 127
  %vm260 = vcmp.lt.s32.totalorder %v259, 64
  %v261 = vsel %vm260, 14, 12
  %vm262 = vcmp.lt.s32.totalorder %v256, %v261
  %vm263 = vcmp.lt.s32.totalorder %v257, %v261
  %v264 = vsel %vm262, 1, 0
  %v265 = vsel %vm263, 1, 0
  %vm266 = vcmp.eq.s32.totalorder %v264, 1
  %vm267 = vcmp.eq.s32.totalorder %v265, 1
  %v268 = vsel %vm266, %v239, 0.0
  %v269 = vsel %vm267, %v240, 0.0
  %v270 = vsel %vm266, %v241, 0.0
  %v271 = vsel %vm267, %v242, 0.0
  %v272 = vsel %vm266, %v243, 0.0
  %v273 = vsel %vm267, %v244, 0.0
  %v274 = vsel %vm266, %v245, 0.0
  %v275 = vsel %vm267, %v246, 0.0
  %v276 = vsel %vm266, %v247, 0.0
  %v277 = vsel %vm267, %v248, 0.0
  %v278 = vsel %vm266, %v249, 0.0
  %v279 = vsel %vm267, %v250, 0.0
  %v280 = vsel %vm266, %v251, 0.0
  %v281 = vsel %vm267, %v252, 0.0
  %v282 = vsel %vm266, %v253, 0.0
  %v283 = vsel %vm267, %v254, 0.0
  %v284 = vmax.f32 %v268, %v269
  %v285 = vrot.slane %v284, 4
  %v286 = vmax.f32 %v284, %v285
  %v287 = vrot.slane %v286, 2
  %v288 = vmax.f32 %v286, %v287
  %v289 = vrot.slane %v288, 1
  %v290 = vmax.f32 %v288, %v289
  %v291 = vmax.f32 %v270, %v271
  %v292 = vrot.slane %v291, 4
  %v293 = vmax.f32 %v291, %v292
  %v294 = vrot.slane %v293, 2
  %v295 = vmax.f32 %v293, %v294
  %v296 = vrot.slane %v295, 1
  %v297 = vmax.f32 %v295, %v296
  %v298 = vmax.f32 %v272, %v273
  %v299 = vrot.slane %v298, 4
  %v300 = vmax.f32 %v298, %v299
  %v301 = vrot.slane %v300, 2
  %v302 = vmax.f32 %v300, %v301
  %v303 = vrot.slane %v302, 1
  %v304 = vmax.f32 %v302, %v303
  %v305 = vmax.f32 %v274, %v275
  %v306 = vrot.slane %v305, 4
  %v307 = vmax.f32 %v305, %v306
  %v308 = vrot.slane %v307, 2
  %v309 = vmax.f32 %v307, %v308
  %v310 = vrot.slane %v309, 1
  %v311 = vmax.f32 %v309, %v310
  %v312 = vmax.f32 %v276, %v277
  %v313 = vrot.slane %v312, 4
  %v314 = vmax.f32 %v312, %v313
  %v315 = vrot.slane %v314, 2
  %v316 = vmax.f32 %v314, %v315
  %v317 = vrot.slane %v316, 1
  %v318 = vmax.f32 %v316, %v317
  %v319 = vmax.f32 %v278, %v279
  %v320 = vrot.slane %v319, 4
  %v321 = vmax.f32 %v319, %v320
  %v322 = vrot.slane %v321, 2
  %v323 = vmax.f32 %v321, %v322
  %v324 = vrot.slane %v323, 1
  %v325 = vmax.f32 %v323, %v324
  %v326 = vmax.f32 %v280, %v281
  %v327 = vrot.slane %v326, 4
  %v328 = vmax.f32 %v326, %v327
  %v329 = vrot.slane %v328, 2
  %v330 = vmax.f32 %v328, %v329
  %v331 = vrot.slane %v330, 1
  %v332 = vmax.f32 %v330, %v331
  %v333 = vmax.f32 %v282, %v283
  %v334 = vrot.slane %v333, 4
  %v335 = vmax.f32 %v333, %v334
  %v336 = vrot.slane %v335, 2
  %v337 = vmax.f32 %v335, %v336
  %v338 = vrot.slane %v337, 1
  %v339 = vmax.f32 %v337, %v338
  %vm340 = vcmp.eq.s32.totalorder %v259, 127
  %vm349 = vcmask 1041409
  %v350 = vsel %vm349, %v297, %v290
  %vm351 = vcmask 1042434
  %v352 = vsel %vm351, %v304, %v350
  %vm353 = vcmask 1043459
  %v354 = vsel %vm353, %v311, %v352
  %vm355 = vcmask 1044484
  %v356 = vsel %vm355, %v318, %v354
  %vm357 = vcmask 1045509
  %v358 = vsel %vm357, %v325, %v356
  %vm359 = vcmask 1046534
  %v360 = vsel %vm359, %v332, %v358
  %vm361 = vcmask 1047559
  %v362 = vsel %vm361, %v339, %v360
  %v364 = vsel %vm340, 1.0, %v362
  %365 = vmatprep.subr.mxu0 0.0
  %366 = vmatpush1.msra.mxu0 %v59
  %367 = vmatprep.subr.mxu0 0.0
  %368 = vmatpush1.msra.mxu0 %v58
  %369 = vmatprep.subr.mxu0 0.0
  %370 = vmatpush1.msra.mxu0 %v57
  %371 = vmatprep.subr.mxu0 0.0
  %372 = vmatpush1.msra.mxu0 %v56
  %373 = vmatprep.subr.mxu0 0.0
  %374 = vmatpush1.msra.mxu0 %v55
  %375 = vmatprep.subr.mxu0 0.0
  %376 = vmatpush1.msra.mxu0 %v54
  %377 = vmatprep.subr.mxu0 0.0
  %378 = vmatpush1.msra.mxu0 %v53
  %379 = vmatprep.subr.mxu0 0.0
  %380 = vmatpush1.msra.mxu0 %v52
  %381 = vmatprep.subr.mxu0 0.0
  %382 = vmatpush1.msra.mxu0 %v51
  %383 = vmatprep.subr.mxu0 0.0
  %384 = vmatpush1.msra.mxu0 %v50
  %385 = vmatprep.subr.mxu0 0.0
  %386 = vmatpush1.msra.mxu0 %v49
  %387 = vmatprep.subr.mxu0 0.0
  %388 = vmatpush1.msra.mxu0 %v48
  %389 = vmatprep.subr.mxu0 0.0
  %390 = vmatpush1.msra.mxu0 %v47
  %391 = vmatprep.subr.mxu0 0.0
  %392 = vmatpush1.msra.mxu0 %v46
  %393 = vmatprep.subr.mxu0 0.0
  %394 = vmatpush1.msra.mxu0 %v45
  %395 = vmatprep.subr.mxu0 0.0
  %396 = vmatpush1.msra.mxu0 %v44
  %397 = vmatprep.subr.mxu0 0.0
  %398 = vmatpush2.msra.mxu0 0.0
  %399 = vmatprep.subr.mxu0 0.0
  %400 = vmatpush2.msra.mxu0 0.0
  %401 = vmatprep.subr.mxu0 0.0
  %402 = vmatpush2.msra.mxu0 0.0
  %403 = vmatprep.subr.mxu0 0.0
  %404 = vmatpush2.msra.mxu0 0.0
  %405 = vmatprep.subr.mxu0 0.0
  %406 = vmatpush2.msra.mxu0 0.0
  %407 = vmatprep.subr.mxu0 0.0
  %408 = vmatpush2.msra.mxu0 0.0
  %409 = vmatprep.subr.mxu0 0.0
  %410 = vmatpush2.msra.mxu0 0.0
  %411 = vmatprep.subr.mxu0 0.0
  %412 = vmatpush2.msra.mxu0 0.0
  %413 = vmatprep.subr.mxu0 0.0
  %414 = vmatpush2.msra.mxu0 0.0
  %415 = vmatprep.subr.mxu0 0.0
  %416 = vmatpush2.msra.mxu0 0.0
  %417 = vmatprep.subr.mxu0 0.0
  %418 = vmatpush2.msra.mxu0 0.0
  %419 = vmatprep.subr.mxu0 0.0
  %420 = vmatpush2.msra.mxu0 0.0
  %421 = vmatprep.subr.mxu0 0.0
  %422 = vmatpush2.msra.mxu0 0.0
  %423 = vmatprep.subr.mxu0 0.0
  %424 = vmatpush2.msra.mxu0 0.0
  %425 = vmatprep.subr.mxu0 0.0
  %426 = vmatpush2.msra.mxu0 0.0
  %427 = vmatprep.subr.mxu0 0.0
  %428 = vmatpush2.msra.mxu0 0.0
  %429 = vmatprep.mubr.f32.mxu0 0.0
  %430 = vmatmul.mubr.f32.gmra.mxu0 %v364
  %v431 = vpop.f32.mrf.mxu0
  %v432 = vadd.f32 0.0, %v431
  %v433 = vpop.f32.mrf.mxu0
  %434 = vdwg.mxu0
  %v435 = vxor.u32 %v432, 2147483648
  %v436 = vmul.f32 %v435, 1.442695
  %v437 = vpow.pop %v436
  %v438 = vadd.f32 %v437, 1.0
  %v439 = vrcp.pop %v438
  %v440 = vmul.f32 1.0, %v439
  %v441 = vsel %vm340, 1.0, %v440
  %442 = vmatprep.subr.mxu0 0.0
  %443 = vmatpush1.msra.mxu0 %v76
  %444 = vmatprep.subr.mxu0 0.0
  %445 = vmatpush1.msra.mxu0 %v75
  %446 = vmatprep.subr.mxu0 0.0
  %447 = vmatpush1.msra.mxu0 %v74
  %448 = vmatprep.subr.mxu0 0.0
  %449 = vmatpush1.msra.mxu0 %v73
  %450 = vmatprep.subr.mxu0 0.0
  %451 = vmatpush1.msra.mxu0 %v72
  %452 = vmatprep.subr.mxu0 0.0
  %453 = vmatpush1.msra.mxu0 %v71
  %454 = vmatprep.subr.mxu0 0.0
  %455 = vmatpush1.msra.mxu0 %v70
  %456 = vmatprep.subr.mxu0 0.0
  %457 = vmatpush1.msra.mxu0 %v69
  %458 = vmatprep.subr.mxu0 0.0
  %459 = vmatpush1.msra.mxu0 %v68
  %460 = vmatprep.subr.mxu0 0.0
  %461 = vmatpush1.msra.mxu0 %v67
  %462 = vmatprep.subr.mxu0 0.0
  %463 = vmatpush1.msra.mxu0 %v66
  %464 = vmatprep.subr.mxu0 0.0
  %465 = vmatpush1.msra.mxu0 %v65
  %466 = vmatprep.subr.mxu0 0.0
  %467 = vmatpush1.msra.mxu0 %v64
  %468 = vmatprep.subr.mxu0 0.0
  %469 = vmatpush1.msra.mxu0 %v63
  %470 = vmatprep.subr.mxu0 0.0
  %471 = vmatpush1.msra.mxu0 %v62
  %472 = vmatprep.subr.mxu0 0.0
  %473 = vmatpush1.msra.mxu0 %v61
  %474 = vmatprep.subr.mxu0 0.0
  %475 = vmatpush2.msra.mxu0 0.0
  %476 = vmatprep.subr.mxu0 0.0
  %477 = vmatpush2.msra.mxu0 0.0
  %478 = vmatprep.subr.mxu0 0.0
  %479 = vmatpush2.msra.mxu0 0.0
  %480 = vmatprep.subr.mxu0 0.0
  %481 = vmatpush2.msra.mxu0 0.0
  %482 = vmatprep.subr.mxu0 0.0
  %483 = vmatpush2.msra.mxu0 0.0
  %484 = vmatprep.subr.mxu0 0.0
  %485 = vmatpush2.msra.mxu0 0.0
  %486 = vmatprep.subr.mxu0 0.0
  %487 = vmatpush2.msra.mxu0 0.0
  %488 = vmatprep.subr.mxu0 0.0
  %489 = vmatpush2.msra.mxu0 0.0
  %490 = vmatprep.subr.mxu0 0.0
  %491 = vmatpush2.msra.mxu0 0.0
  %492 = vmatprep.subr.mxu0 0.0
  %493 = vmatpush2.msra.mxu0 0.0
  %494 = vmatprep.subr.mxu0 0.0
  %495 = vmatpush2.msra.mxu0 0.0
  %496 = vmatprep.subr.mxu0 0.0
  %497 = vmatpush2.msra.mxu0 0.0
  %498 = vmatprep.subr.mxu0 0.0
  %499 = vmatpush2.msra.mxu0 0.0
  %500 = vmatprep.subr.mxu0 0.0
  %501 = vmatpush2.msra.mxu0 0.0
  %502 = vmatprep.subr.mxu0 0.0
  %503 = vmatpush2.msra.mxu0 0.0
  %504 = vmatprep.subr.mxu0 0.0
  %505 = vmatpush2.msra.mxu0 0.0
  %506 = vmatprep.mubr.f32.mxu0 0.0
  %507 = vmatmul.mubr.f32.gmra.mxu0 %v441
  %v508 = vpop.f32.mrf.mxu0
  %v509 = vadd.f32 0.0, %v508
  %v510 = vpop.f32.mrf.mxu0
  %511 = vdwg.mxu0
  %v512 = vxor.u32 %v509, 2147483648
  %v513 = vmul.f32 %v512, 1.442695
  %v514 = vpow.pop %v513
  %v515 = vadd.f32 %v514, 1.0
  %v516 = vrcp.pop %v515
  %v517 = vmul.f32 1.0, %v516
  %v518 = vsel %vm340, 1.0, %v517
  %519 = vmatprep.subr.mxu0 0.0
  %520 = vmatpush1.msra.mxu0 %v93
  %521 = vmatprep.subr.mxu0 0.0
  %522 = vmatpush1.msra.mxu0 %v92
  %523 = vmatprep.subr.mxu0 0.0
  %524 = vmatpush1.msra.mxu0 %v91
  %525 = vmatprep.subr.mxu0 0.0
  %526 = vmatpush1.msra.mxu0 %v90
  %527 = vmatprep.subr.mxu0 0.0
  %528 = vmatpush1.msra.mxu0 %v89
  %529 = vmatprep.subr.mxu0 0.0
  %530 = vmatpush1.msra.mxu0 %v88
  %531 = vmatprep.subr.mxu0 0.0
  %532 = vmatpush1.msra.mxu0 %v87
  %533 = vmatprep.subr.mxu0 0.0
  %534 = vmatpush1.msra.mxu0 %v86
  %535 = vmatprep.subr.mxu0 0.0
  %536 = vmatpush1.msra.mxu0 %v85
  %537 = vmatprep.subr.mxu0 0.0
  %538 = vmatpush1.msra.mxu0 %v84
  %539 = vmatprep.subr.mxu0 0.0
  %540 = vmatpush1.msra.mxu0 %v83
  %541 = vmatprep.subr.mxu0 0.0
  %542 = vmatpush1.msra.mxu0 %v82
  %543 = vmatprep.subr.mxu0 0.0
  %544 = vmatpush1.msra.mxu0 %v81
  %545 = vmatprep.subr.mxu0 0.0
  %546 = vmatpush1.msra.mxu0 %v80
  %547 = vmatprep.subr.mxu0 0.0
  %548 = vmatpush1.msra.mxu0 %v79
  %549 = vmatprep.subr.mxu0 0.0
  %550 = vmatpush1.msra.mxu0 %v78
  %551 = vmatprep.subr.mxu0 0.0
  %552 = vmatpush2.msra.mxu0 0.0
  %553 = vmatprep.subr.mxu0 0.0
  %554 = vmatpush2.msra.mxu0 0.0
  %555 = vmatprep.subr.mxu0 0.0
  %556 = vmatpush2.msra.mxu0 0.0
  %557 = vmatprep.subr.mxu0 0.0
  %558 = vmatpush2.msra.mxu0 0.0
  %559 = vmatprep.subr.mxu0 0.0
  %560 = vmatpush2.msra.mxu0 0.0
  %561 = vmatprep.subr.mxu0 0.0
  %562 = vmatpush2.msra.mxu0 0.0
  %563 = vmatprep.subr.mxu0 0.0
  %564 = vmatpush2.msra.mxu0 0.0
  %565 = vmatprep.subr.mxu0 0.0
  %566 = vmatpush2.msra.mxu0 0.0
  %567 = vmatprep.subr.mxu0 0.0
  %568 = vmatpush2.msra.mxu0 0.0
  %569 = vmatprep.subr.mxu0 0.0
  %570 = vmatpush2.msra.mxu0 0.0
  %571 = vmatprep.subr.mxu0 0.0
  %572 = vmatpush2.msra.mxu0 0.0
  %573 = vmatprep.subr.mxu0 0.0
  %574 = vmatpush2.msra.mxu0 0.0
  %575 = vmatprep.subr.mxu0 0.0
  %576 = vmatpush2.msra.mxu0 0.0
  %577 = vmatprep.subr.mxu0 0.0
  %578 = vmatpush2.msra.mxu0 0.0
  %579 = vmatprep.subr.mxu0 0.0
  %580 = vmatpush2.msra.mxu0 0.0
  %581 = vmatprep.subr.mxu0 0.0
  %582 = vmatpush2.msra.mxu0 0.0
  %583 = vmatprep.mubr.f32.mxu0 0.0
  %584 = vmatmul.mubr.f32.gmra.mxu0 %v518
  %v585 = vpop.f32.mrf.mxu0
  %v586 = vadd.f32 0.0, %v585
  %v587 = vpop.f32.mrf.mxu0
  %588 = vdwg.mxu0
  %589 = vst [vmem:[%s2] sm:$0xff] %v586
  // Predicated region
  $region10: #{textcnn_forward.1} parent=0 // pred_check
    _
  $region11: #{textcnn_forward.1} parent=0 // pred_check_branch
    %591 = sbr.rel (0) target = $region13
  $region12: #{textcnn_forward.1} parent=0 // pred_region
    _
  $region13: #{textcnn_forward.1} parent=0 // pred_fallthru
    _
  // Predicated region
  $region14: #{textcnn_forward.1} parent=0 // pred_check
    _
  $region15: #{textcnn_forward.1} parent=0 // pred_check_branch
    %593 = sbr.rel (0) target = $region17
  $region16: #{textcnn_forward.1} parent=0 // pred_region
    _
  $region17: #{textcnn_forward.1} parent=0 // pred_fallthru
    _

</llo_original>
